<compile_context>
chip_gen: v7x
topology: tpu7x:2x2x1
jax: 0.10.0
libtpu: 0.0.40
codegen_flags: <defaults>
</compile_context>

<pallas_src>
import numpy as np
import jax
import jax.numpy as jnp
from jax.experimental import pallas as pl
from jax.experimental.pallas import tpu as pltpu

# Problem constants (fixed by the PyTorch module and its input x = randn(1,3,10,10)).
CIN, COUT1, COUT2 = 3, 10, 3
H = W = 10
KH = KW = 3
HO, WO = H - KH + 1, W - KW + 1          # 8, 8
NTAP = KH * KW                           # 9
S_IN = H * W                             # 100  (flattened 10x10 spatial)
S_MID = HO * WO                          # 64   (flattened 8x8 spatial)
NIN = CIN * S_IN                         # 300  (flattened input  = K of the dot)
NOUT = COUT2 * S_IN                      # 300  (flattened output = N of the dot)


def _build_gather_scatter_np():
    """G[t] (S_IN, S_MID): 0/1 im2col matrix for the valid 3x3 conv.
    S[t] = G[t]^T: col2im matrix for the stride-1 conv-transpose (the transposed
    conv's implicit zero padding is encoded in the zeros of S).
    Host-side (numpy) only: used to fold the operator, never sent to the TPU."""
    g = np.zeros((NTAP, S_IN, S_MID), np.float32)
    for i in range(KH):
        for j in range(KW):
            t = i * KW + j
            for r in range(HO):
                for c in range(WO):
                    g[t, (r + i) * W + (c + j), r * WO + c] = 1.0
    s = np.ascontiguousarray(np.transpose(g, (0, 2, 1)))
    return g, s


_G_NP, _S_NP = _build_gather_scatter_np()


def prepare_params(w1, b1, w2, b2):
    """Fold Conv2d(3,10,3) -> identity Dropout -> ConvTranspose2d(10,3,3) into a
    single affine map (A, b_eff), computed once on the host.

    w1: (COUT1, CIN, KH, KW)   Conv2d weight
    b1: (COUT1,)               Conv2d bias
    w2: (COUT1, COUT2, KH, KW) ConvTranspose2d weight (PyTorch [in, out, kh, kw])
    b2: (COUT2,)               ConvTranspose2d bias

    Returns:
      A     (NIN, NOUT)  so that out_flat = x_flat @ A + b_eff
      b_eff (1,   NOUT)
    """
    w1n = np.asarray(w1, np.float32)
    b1n = np.asarray(b1, np.float32)
    w2n = np.asarray(w2, np.float32)
    b2n = np.asarray(b2, np.float32)

    # Per-tap 2-D weight blocks: w1_taps[t][m, c] = w1[m, c, i, j], t = i*KW + j
    #                            w2_taps[t][o, m] = w2[m, o, i, j]
    w1_taps = np.transpose(w1n, (2, 3, 0, 1)).reshape(NTAP, COUT1, CIN)
    w2_taps = np.transpose(w2n, (2, 3, 1, 0)).reshape(NTAP, COUT2, COUT1)

    # A[c, p, o, r] = sum_{t,s,m,q} G[t,p,q] W1[t,m,c] W2[s,o,m] S[s,q,r]
    a4 = np.einsum('tpq,tmc,som,sqr->cpor', _G_NP, w1_taps, w2_taps, _S_NP,
                   optimize=True)
    a_mat = np.ascontiguousarray(a4.reshape(NIN, NOUT))

    # Effective bias: convT applied to the (spatially constant) conv1 bias + b2.
    b_eff = b2n[:, None] + np.einsum('som,m,sqr->or', w2_taps, b1n, _S_NP,
                                     optimize=True)
    return (jnp.asarray(a_mat, jnp.float32),
            jnp.asarray(b_eff.reshape(1, NOUT), jnp.float32))


def _fused_kernel(x_ref, a_ref, b_ref, o_ref):
    """x_ref: (1, NIN)     flattened input image (channel-major, lane-dense)
       a_ref: (NIN, NOUT)  folded conv1∘dropout∘convT operator
       b_ref: (1, NOUT)    folded effective bias
       o_ref: (1, NOUT)    flattened output image"""
    # t1 (conv) -> t2 (identity dropout) -> t3 (conv-transpose), folded: one dot.
    o_ref[...] = (jnp.dot(x_ref[...], a_ref[...],
                          preferred_element_type=jnp.float32)
                  + b_ref[...]).astype(o_ref.dtype)


_FLOPS = 2 * NIN * NOUT + NOUT                       # one dot + bias add
_BYTES = 4 * (NIN + NIN * NOUT + NOUT + NOUT)        # x + A + b_eff + out


def fused_forward(x_nchw, a_mat, b_eff):
    assert x_nchw.shape == (1, CIN, H, W), x_nchw.shape
    x_row = x_nchw.reshape(1, NIN).astype(jnp.float32)   # (1, 300), lane-dense
    vmem = pl.BlockSpec(memory_space=pltpu.MemorySpace.VMEM)
    out_row = pl.pallas_call(
        _fused_kernel,
        out_shape=jax.ShapeDtypeStruct((1, NOUT), jnp.float32),
        in_specs=[vmem, vmem, vmem],
        out_specs=vmem,
        cost_estimate=pl.CostEstimate(flops=_FLOPS, transcendentals=0,
                                      bytes_accessed=_BYTES),
    )(x_row, a_mat, b_eff)
    return out_row.reshape(1, COUT2, H, W)


# ----------------------------------------------------------------------------
# numpy references (sanity check of the same math)
# ----------------------------------------------------------------------------
def _ref_conv(x, w, b):
    cout, cin, kh, kw = w.shape
    _, h, wd = x.shape
    ho, wo = h - kh + 1, wd - kw + 1
    out = np.zeros((cout, ho, wo), np.float32)
    for i in range(kh):
        for j in range(kw):
            out += np.einsum('oc,chw->ohw', w[:, :, i, j], x[:, i:i + ho, j:j + wo])
    return out + b[:, None, None]


def _ref_convT(x, wt, b):
    cin, cout, kh, kw = wt.shape
    _, h, wd = x.shape
    out = np.zeros((cout, h + kh - 1, wd + kw - 1), np.float32)
    for i in range(kh):
        for j in range(kw):
            out[:, i:i + h, j:j + wd] += np.einsum('co,chw->ohw', wt[:, :, i, j], x)
    return out + b[:, None, None]


if __name__ == "__main__":
    key = jax.random.PRNGKey(0)
    k1, k2, k3, k4, k5 = jax.random.split(key, 5)

    # Input, matching the PyTorch script: x = torch.randn(1, 3, 10, 10)
    x = jax.random.normal(k1, (1, CIN, H, W), dtype=jnp.float32)

    # Conv2d(3, 10, 3): weight (10, 3, 3, 3), bias (10,)
    fan1 = CIN * KH * KW
    w1 = jax.random.uniform(k2, (COUT1, CIN, KH, KW), jnp.float32, -1.0, 1.0) / np.sqrt(fan1)
    b1 = jax.random.uniform(k3, (COUT1,), jnp.float32, -1.0, 1.0) / np.sqrt(fan1)

    # ConvTranspose2d(10, 3, 3): weight (10, 3, 3, 3) [in, out, kH, kW], bias (3,)
    fan2 = COUT1 * KH * KW
    w2 = jax.random.uniform(k4, (COUT1, COUT2, KH, KW), jnp.float32, -1.0, 1.0) / np.sqrt(fan2)
    b2 = jax.random.uniform(k5, (COUT2,), jnp.float32, -1.0, 1.0) / np.sqrt(fan2)

    a_mat, b_eff = prepare_params(w1, b1, w2, b2)
    fwd = jax.jit(fused_forward)
    out = jax.block_until_ready(fwd(x, a_mat, b_eff))
    assert out.shape == (1, COUT2, H, W), out.shape

    # Sanity check against a numpy reference of the un-folded math.
    # Tolerance leaves headroom for the MXU's internal matmul precision mode;
    # layout / folding bugs would show up as O(1) mismatches.
    xn, w1n, b1n, w2n, b2n = (np.asarray(a) for a in (x, w1, b1, w2, b2))
    ref = _ref_convT(_ref_conv(xn[0], w1n, b1n), w2n, b2n)[None]
    np.testing.assert_allclose(np.asarray(out), ref, rtol=2e-2, atol=2e-2)

    print("KERNEL_OK")
</pallas_src>

<mosaic_0001>
module attributes {stable_mosaic.version = 11 : i64} {
  func.func @_fused_kernel(%arg0: memref<1x300xf32, #tpu.memory_space<vmem>>, %arg1: memref<300x300xf32, #tpu.memory_space<vmem>>, %arg2: memref<1x300xf32, #tpu.memory_space<vmem>>, %arg3: memref<1x300xf32, #tpu.memory_space<vmem>>) attributes {dimension_semantics = [], scalar_prefetch = 0 : i64, scratch_operands = 0 : i64, tpu.core_type = #tpu.core_type<tc>} {
    %c0 = arith.constant 0 : index
    %c0_0 = arith.constant 0 : index
    %0 = vector.load %arg0[%c0, %c0_0] : memref<1x300xf32, #tpu.memory_space<vmem>>, vector<1x300xf32>
    %c0_1 = arith.constant 0 : index
    %c0_2 = arith.constant 0 : index
    %1 = vector.load %arg1[%c0_1, %c0_2] : memref<300x300xf32, #tpu.memory_space<vmem>>, vector<300x300xf32>
    %cst = arith.constant dense<0.000000e+00> : vector<1x300xf32>
    %2 = tpu.matmul %0, %1, %cst {dimension_numbers = #tpu.dot_dimension_numbers<[1], [0], [0], [1], [0, 0, 1, 1], [], []>} : vector<1x300xf32>, vector<300x300xf32>, vector<1x300xf32> -> vector<1x300xf32>
    %c0_3 = arith.constant 0 : index
    %c0_4 = arith.constant 0 : index
    %3 = vector.load %arg2[%c0_3, %c0_4] : memref<1x300xf32, #tpu.memory_space<vmem>>, vector<1x300xf32>
    %4 = arith.addf %2, %3 : vector<1x300xf32>
    %c0_5 = arith.constant 0 : index
    %c0_6 = arith.constant 0 : index
    %5 = vector.load %arg3[%c0_5, %c0_6] : memref<1x300xf32, #tpu.memory_space<vmem>>, vector<1x300xf32>
    tpu.vector_store %arg3[%c0_5, %c0_6], %4 {strides = array<i32>} : memref<1x300xf32, #tpu.memory_space<vmem>>, vector<1x300xf32>,
    return
  }
}

</mosaic_0001>

<llo_original>
// kernel: fused_forward.1
$region0: #{fused_forward.1}
  #allocation0 [shape = 'u32[]', space=smem, size = 0x4, offset = 0x4, fixed_abs, tag = 'smem constant byte address 0x4 - core index']
  #allocation1 [shape = 'u32[144,128]{1,0:T(1,128)}', space=vmem, size = 0x12000, scoped, tag = 'internal scratch']
  %s0 = inlined_call_operand.vmem [shape: f32[1,300], index: 0, kind: input, shape index: {}]
  %s1 = inlined_call_operand.hbm [shape: f32[300,300], index: 1, kind: input, shape index: {}]
  %s2 = inlined_call_operand.vmem [shape: f32[1,300], index: 2, kind: input, shape index: {}]
  %s3 = inlined_call_operand.vmem [shape: f32[1,300], index: 3, kind: output, shape index: {}]
  %s4 = sld [smem:[#allocation0]]
  $region26: #{fused_forward.1} parent=0
    _
  %s6 = ssub.s32 1, %s4
  %s7 = scalar_select 0, %s6, %s4
  $region1: #{fused_forward.1} parent=0
    #allocation2 [shape = 'u8[466944]{0}', space=vmem, size = 0x72000, scoped, tag = 'input window, operand 1, single buffered']
    #allocation3 [shape = 's32[1]{0}', space=sflag, size = 0x4, scoped, tag = 'scoped memory for fused_forward.1']
    %8 = vsyncpa [#allocation3], 0
    // Predicated region
    $region2: #{fused_forward.1} parent=1 // pred_check
      _
    $region3: #{fused_forward.1} parent=1 // pred_check_branch
      %10 = sbr.rel (0) target = $region5
    $region4: #{fused_forward.1} parent=1 // pred_region
      _
    $region5: #{fused_forward.1} parent=1 // pred_fallthru
      _
    // Predicated region
    $region6: #{fused_forward.1} parent=1 // pred_check
      _
    $region7: #{fused_forward.1} parent=1 // pred_check_branch
      %12 = sbr.rel (0) target = $region9
    $region8: #{fused_forward.1} parent=1 // pred_region
      %s14 = ssub.s32 14592, 14592
      %15 = vsyncadd [#allocation3], %s14
      %s16 = sshll.u32 [#allocation2], 4
      %s17 = int_to_ptr.vmem [resolvable:$true] %s16
      %22 = dma.hbm_to_vmem [thread:$0]  %s1, 14592, %s17, [#allocation3], 384, 384, 24
    $region9: #{fused_forward.1} parent=1 // pred_fallthru
      _
    // Predicated region
    $region10: #{fused_forward.1} parent=1 // pred_check
      _
    $region11: #{fused_forward.1} parent=1 // pred_check_branch
      %24 = sbr.rel (0) target = $region13
    $region12: #{fused_forward.1} parent=1 // pred_region
      _
    $region13: #{fused_forward.1} parent=1 // pred_fallthru
      _
    // Predicated region
    $region14: #{fused_forward.1} parent=1 // pred_check
      _
    $region15: #{fused_forward.1} parent=1 // pred_check_branch
      %26 = sbr.rel (0) target = $region17
    $region16: #{fused_forward.1} parent=1 // pred_region
      %27 = dma.done [#allocation3], 14592
    $region17: #{fused_forward.1} parent=1 // pred_fallthru
      _
    %v28 = vld [vmem:[%s0] sm:$0x7]
    %v29 = vld [vmem:[#allocation2] sm:$0xff]
    %v30 = vld [vmem:[#allocation2 + $0x8] sm:$0xff]
    %v31 = vld [vmem:[#allocation2 + $0x10] sm:$0xff]
    %v32 = vld [vmem:[#allocation2 + $0x18] sm:$0xff]
    %v33 = vld [vmem:[#allocation2 + $0x20] sm:$0xff]
    %v34 = vld [vmem:[#allocation2 + $0x28] sm:$0xff]
    %v35 = vld [vmem:[#allocation2 + $0x30] sm:$0xff]
    %v36 = vld [vmem:[#allocation2 + $0x38] sm:$0xff]
    %v37 = vld [vmem:[#allocation2 + $0x40] sm:$0xff]
    %v38 = vld [vmem:[#allocation2 + $0x48] sm:$0xff]
    %v39 = vld [vmem:[#allocation2 + $0x50] sm:$0xff]
    %v40 = vld [vmem:[#allocation2 + $0x58] sm:$0xff]
    %v41 = vld [vmem:[#allocation2 + $0x60] sm:$0xff]
    %v42 = vld [vmem:[#allocation2 + $0x68] sm:$0xff]
    %v43 = vld [vmem:[#allocation2 + $0x70] sm:$0xff]
    %v44 = vld [vmem:[#allocation2 + $0x78] sm:$0xff]
    %v45 = vld [vmem:[#allocation2 + $0x80] sm:$0xff]
    %v46 = vld [vmem:[#allocation2 + $0x88] sm:$0xff]
    %v47 = vld [vmem:[#allocation2 + $0x90] sm:$0xff]
    %v48 = vld [vmem:[#allocation2 + $0x98] sm:$0xff]
    %v49 = vld [vmem:[#allocation2 + $0xa0] sm:$0xff]
    %v50 = vld [vmem:[#allocation2 + $0xa8] sm:$0xff]
    %v51 = vld [vmem:[#allocation2 + $0xb0] sm:$0xff]
    %v52 = vld [vmem:[#allocation2 + $0xb8] sm:$0xff]
    %v53 = vld [vmem:[#allocation2 + $0xc0] sm:$0xff]
    %v54 = vld [vmem:[#allocation2 + $0xc8] sm:$0xff]
    %v55 = vld [vmem:[#allocation2 + $0xd0] sm:$0xff]
    %v56 = vld [vmem:[#allocation2 + $0xd8] sm:$0xff]
    %v57 = vld [vmem:[#allocation2 + $0xe0] sm:$0xff]
    %v58 = vld [vmem:[#allocation2 + $0xe8] sm:$0xff]
    %v59 = vld [vmem:[#allocation2 + $0xf0] sm:$0xff]
    %v60 = vld [vmem:[#allocation2 + $0xf8] sm:$0xff]
    %v61 = vld [vmem:[#allocation2 + $0x100] sm:$0xff]
    %v62 = vld [vmem:[#allocation2 + $0x108] sm:$0xff]
    %v63 = vld [vmem:[#allocation2 + $0x110] sm:$0xff]
    %v64 = vld [vmem:[#allocation2 + $0x118] sm:$0xff]
    %v65 = vld [vmem:[#allocation2 + $0x120] sm:$0xff]
    %v66 = vld [vmem:[#allocation2 + $0x128] sm:$0xff]
    %v67 = vld [vmem:[#allocation2 + $0x130] sm:$0xff]
    %v68 = vld [vmem:[#allocation2 + $0x138] sm:$0xff]
    %v69 = vld [vmem:[#allocation2 + $0x140] sm:$0xff]
    %v70 = vld [vmem:[#allocation2 + $0x148] sm:$0xff]
    %v71 = vld [vmem:[#allocation2 + $0x150] sm:$0xff]
    %v72 = vld [vmem:[#allocation2 + $0x158] sm:$0xff]
    %v73 = vld [vmem:[#allocation2 + $0x160] sm:$0xff]
    %v74 = vld [vmem:[#allocation2 + $0x168] sm:$0xff]
    %v75 = vld [vmem:[#allocation2 + $0x170] sm:$0xff]
    %v76 = vld [vmem:[#allocation2 + $0x178] sm:$0xff]
    %v77 = vld [vmem:[#allocation2 + $0x180] sm:$0xff]
    %v78 = vld [vmem:[#allocation2 + $0x188] sm:$0xff]
    %v79 = vld [vmem:[#allocation2 + $0x190] sm:$0xff]
    %v80 = vld [vmem:[#allocation2 + $0x198] sm:$0xff]
    %v81 = vld [vmem:[#allocation2 + $0x1a0] sm:$0xff]
    %v82 = vld [vmem:[#allocation2 + $0x1a8] sm:$0xff]
    %v83 = vld [vmem:[#allocation2 + $0x1b0] sm:$0xff]
    %v84 = vld [vmem:[#allocation2 + $0x1b8] sm:$0xff]
    %v85 = vld [vmem:[#allocation2 + $0x1c0] sm:$0xff]
    %v86 = vld [vmem:[#allocation2 + $0x1c8] sm:$0xff]
    %v87 = vld [vmem:[#allocation2 + $0x1d0] sm:$0xff]
    %v88 = vld [vmem:[#allocation2 + $0x1d8] sm:$0xff]
    %v89 = vld [vmem:[#allocation2 + $0x1e0] sm:$0xff]
    %v90 = vld [vmem:[#allocation2 + $0x1e8] sm:$0xff]
    %v91 = vld [vmem:[#allocation2 + $0x1f0] sm:$0xff]
    %v92 = vld [vmem:[#allocation2 + $0x1f8] sm:$0xff]
    %v93 = vld [vmem:[#allocation2 + $0x200] sm:$0xff]
    %v94 = vld [vmem:[#allocation2 + $0x208] sm:$0xff]
    %v95 = vld [vmem:[#allocation2 + $0x210] sm:$0xff]
    %v96 = vld [vmem:[#allocation2 + $0x218] sm:$0xff]
    %v97 = vld [vmem:[#allocation2 + $0x220] sm:$0xff]
    %v98 = vld [vmem:[#allocation2 + $0x228] sm:$0xff]
    %v99 = vld [vmem:[#allocation2 + $0x230] sm:$0xff]
    %v100 = vld [vmem:[#allocation2 + $0x238] sm:$0xff]
    %v101 = vld [vmem:[#allocation2 + $0x240] sm:$0xff]
    %v102 = vld [vmem:[#allocation2 + $0x248] sm:$0xff]
    %v103 = vld [vmem:[#allocation2 + $0x250] sm:$0xff]
    %v104 = vld [vmem:[#allocation2 + $0x258] sm:$0xff]
    %v105 = vld [vmem:[#allocation2 + $0x260] sm:$0xff]
    %v106 = vld [vmem:[#allocation2 + $0x268] sm:$0xff]
    %v107 = vld [vmem:[#allocation2 + $0x270] sm:$0xff]
    %v108 = vld [vmem:[#allocation2 + $0x278] sm:$0xff]
    %v109 = vld [vmem:[#allocation2 + $0x280] sm:$0xff]
    %v110 = vld [vmem:[#allocation2 + $0x288] sm:$0xff]
    %v111 = vld [vmem:[#allocation2 + $0x290] sm:$0xff]
    %v112 = vld [vmem:[#allocation2 + $0x298] sm:$0xff]
    %v113 = vld [vmem:[#allocation2 + $0x2a0] sm:$0xff]
    %v114 = vld [vmem:[#allocation2 + $0x2a8] sm:$0xff]
    %v115 = vld [vmem:[#allocation2 + $0x2b0] sm:$0xff]
    %v116 = vld [vmem:[#allocation2 + $0x2b8] sm:$0xff]
    %v117 = vld [vmem:[#allocation2 + $0x2c0] sm:$0xff]
    %v118 = vld [vmem:[#allocation2 + $0x2c8] sm:$0xff]
    %v119 = vld [vmem:[#allocation2 + $0x2d0] sm:$0xff]
    %v120 = vld [vmem:[#allocation2 + $0x2d8] sm:$0xff]
    %v121 = vld [vmem:[#allocation2 + $0x2e0] sm:$0xff]
    %v122 = vld [vmem:[#allocation2 + $0x2e8] sm:$0xff]
    %v123 = vld [vmem:[#allocation2 + $0x2f0] sm:$0xff]
    %v124 = vld [vmem:[#allocation2 + $0x2f8] sm:$0xff]
    %v125 = vld [vmem:[#allocation2 + $0x300] sm:$0xff]
    %v126 = vld [vmem:[#allocation2 + $0x308] sm:$0xff]
    %v127 = vld [vmem:[#allocation2 + $0x310] sm:$0xff]
    %v128 = vld [vmem:[#allocation2 + $0x318] sm:$0xff]
    %v129 = vld [vmem:[#allocation2 + $0x320] sm:$0xff]
    %v130 = vld [vmem:[#allocation2 + $0x328] sm:$0xff]
    %v131 = vld [vmem:[#allocation2 + $0x330] sm:$0xff]
    %v132 = vld [vmem:[#allocation2 + $0x338] sm:$0xff]
    %v133 = vld [vmem:[#allocation2 + $0x340] sm:$0xff]
    %v134 = vld [vmem:[#allocation2 + $0x348] sm:$0xff]
    %v135 = vld [vmem:[#allocation2 + $0x350] sm:$0xff]
    %v136 = vld [vmem:[#allocation2 + $0x358] sm:$0xff]
    %v137 = vld [vmem:[#allocation2 + $0x360] sm:$0xff]
    %v138 = vld [vmem:[#allocation2 + $0x368] sm:$0xff]
    %v139 = vld [vmem:[#allocation2 + $0x370] sm:$0xff]
    %v140 = vld [vmem:[#allocation2 + $0x378] sm:$0xf]
    %v141 = vld [vmem:[#allocation2 + $0x380] sm:$0xf]
    %v142 = vld [vmem:[#allocation2 + $0x388] sm:$0xf]
    %v143 = vld [vmem:[%s2] sm:$0x7]
    %v145 = vlaneseq
    %v146 = vshrl.u32 %v145, 7
    %v147 = vsub.s32 0, %v146
    %v148 = vrot.slane %v28, %v147
    %v149 = vlaneseq
    %v150 = vshrl.u32 %v149, 7
    %v151 = vsub.s32 1, %v150
    %v152 = vrot.slane %v28, %v151
    %v153 = vlaneseq
    %v154 = vshrl.u32 %v153, 7
    %v155 = vsub.s32 2, %v154
    %v156 = vrot.slane %v28, %v155
    %v160 = vlaneseq
    %v161 = vshrl.u32 %v160, 7
    %v162 = vsub.s32 0, %v161
    %v163 = vrot.slane %v143, %v162
    %v164 = vlaneseq
    %v165 = vshrl.u32 %v164, 7
    %v166 = vsub.s32 1, %v165
    %v167 = vrot.slane %v143, %v166
    %v168 = vlaneseq
    %v169 = vshrl.u32 %v168, 7
    %v170 = vsub.s32 2, %v169
    %v171 = vrot.slane %v143, %v170
    %vm175 = vcmask 359424
    %v176 = vsel %vm175, %v156, 0
    %vm178 = vcmask 1043456
    %v180 = vsel %vm178, %v140, 0
    %v183 = vsel %vm178, %v141, 0
    %v186 = vsel %vm178, %v142, 0
    %188 = vmatprep.subr.mxu0 %v30
    %189 = vmatpush1.msra.mxu0 %v29
    %190 = vmatprep.subr.mxu0 %v33
    %191 = vmatpush1.msra.mxu0 %v32
    %192 = vmatprep.subr.mxu0 %v36
    %193 = vmatpush1.msra.mxu0 %v35
    %194 = vmatprep.subr.mxu0 %v39
    %195 = vmatpush1.msra.mxu0 %v38
    %196 = vmatprep.subr.mxu0 %v42
    %197 = vmatpush1.msra.mxu0 %v41
    %198 = vmatprep.subr.mxu0 %v45
    %199 = vmatpush1.msra.mxu0 %v44
    %200 = vmatprep.subr.mxu0 %v48
    %201 = vmatpush1.msra.mxu0 %v47
    %202 = vmatprep.subr.mxu0 %v51
    %203 = vmatpush1.msra.mxu0 %v50
    %204 = vmatprep.subr.mxu0 %v54
    %205 = vmatpush1.msra.mxu0 %v53
    %206 = vmatprep.subr.mxu0 %v57
    %207 = vmatpush1.msra.mxu0 %v56
    %208 = vmatprep.subr.mxu0 %v60
    %209 = vmatpush1.msra.mxu0 %v59
    %210 = vmatprep.subr.mxu0 %v63
    %211 = vmatpush1.msra.mxu0 %v62
    %212 = vmatprep.subr.mxu0 %v66
    %213 = vmatpush1.msra.mxu0 %v65
    %214 = vmatprep.subr.mxu0 %v69
    %215 = vmatpush1.msra.mxu0 %v68
    %216 = vmatprep.subr.mxu0 %v72
    %217 = vmatpush1.msra.mxu0 %v71
    %218 = vmatprep.subr.mxu0 %v75
    %219 = vmatpush1.msra.mxu0 %v74
    %220 = vmatprep.subr.mxu0 %v78
    %221 = vmatpush1.msra.mxu0 %v77
    %222 = vmatprep.subr.mxu0 %v81
    %223 = vmatpush1.msra.mxu0 %v80
    %224 = vmatprep.subr.mxu0 %v84
    %225 = vmatpush1.msra.mxu0 %v83
    %226 = vmatprep.subr.mxu0 %v87
    %227 = vmatpush1.msra.mxu0 %v86
    %228 = vmatprep.subr.mxu0 %v90
    %229 = vmatpush1.msra.mxu0 %v89
    %230 = vmatprep.subr.mxu0 %v93
    %231 = vmatpush1.msra.mxu0 %v92
    %232 = vmatprep.subr.mxu0 %v96
    %233 = vmatpush1.msra.mxu0 %v95
    %234 = vmatprep.subr.mxu0 %v99
    %235 = vmatpush1.msra.mxu0 %v98
    %236 = vmatprep.subr.mxu0 %v102
    %237 = vmatpush1.msra.mxu0 %v101
    %238 = vmatprep.subr.mxu0 %v105
    %239 = vmatpush1.msra.mxu0 %v104
    %240 = vmatprep.subr.mxu0 %v108
    %241 = vmatpush1.msra.mxu0 %v107
    %242 = vmatprep.subr.mxu0 %v111
    %243 = vmatpush1.msra.mxu0 %v110
    %244 = vmatprep.subr.mxu0 %v114
    %245 = vmatpush1.msra.mxu0 %v113
    %246 = vmatprep.subr.mxu0 %v117
    %247 = vmatpush1.msra.mxu0 %v116
    %248 = vmatprep.subr.mxu0 %v120
    %249 = vmatpush1.msra.mxu0 %v119
    %250 = vmatprep.subr.mxu0 %v123
    %251 = vmatpush1.msra.mxu0 %v122
    %252 = vmatprep.mubr.f32.mxu0 %v152
    %253 = vmatmul.mubr.f32.gmra.mrb[0].mxu0 %v148
    %v254 = vpop.f32.mrb[0].mxu0
    %v255 = vadd.f32 %v163, %v254
    %v256 = vpop.f32.mrb[0].mxu0
    %v257 = vadd.f32 %v167, %v256
    %258 = vdwg.mxu0
    %259 = vmatprep.subr.mxu0 %v126
    %260 = vmatpush1.msra.mxu0 %v125
    %261 = vmatprep.subr.mxu0 %v129
    %262 = vmatpush1.msra.mxu0 %v128
    %263 = vmatprep.subr.mxu0 %v132
    %264 = vmatpush1.msra.mxu0 %v131
    %265 = vmatprep.subr.mxu0 %v135
    %266 = vmatpush1.msra.mxu0 %v134
    %267 = vmatprep.subr.mxu0 %v138
    %268 = vmatpush1.msra.mxu0 %v137
    %269 = vmatprep.subr.mxu0 %v183
    %270 = vmatpush1.msra.mxu0 %v180
    %271 = vmatprep.subr.mxu0 0.0
    %272 = vmatpush1.msra.mxu0 0.0
    %273 = vmatprep.subr.mxu0 0.0
    %274 = vmatpush1.msra.mxu0 0.0
    %275 = vmatprep.subr.mxu0 0.0
    %276 = vmatpush1.msra.mxu0 0.0
    %277 = vmatprep.subr.mxu0 0.0
    %278 = vmatpush1.msra.mxu0 0.0
    %279 = vmatprep.subr.mxu0 0.0
    %280 = vmatpush1.msra.mxu0 0.0
    %281 = vmatprep.subr.mxu0 0.0
    %282 = vmatpush1.msra.mxu0 0.0
    %283 = vmatprep.subr.mxu0 0.0
    %284 = vmatpush1.msra.mxu0 0.0
    %285 = vmatprep.subr.mxu0 0.0
    %286 = vmatpush1.msra.mxu0 0.0
    %287 = vmatprep.subr.mxu0 0.0
    %288 = vmatpush1.msra.mxu0 0.0
    %289 = vmatprep.subr.mxu0 0.0
    %290 = vmatpush1.msra.mxu0 0.0
    %291 = vmatprep.subr.mxu0 0.0
    %292 = vmatpush1.msra.mxu0 0.0
    %293 = vmatprep.subr.mxu0 0.0
    %294 = vmatpush1.msra.mxu0 0.0
    %295 = vmatprep.subr.mxu0 0.0
    %296 = vmatpush1.msra.mxu0 0.0
    %297 = vmatprep.subr.mxu0 0.0
    %298 = vmatpush1.msra.mxu0 0.0
    %299 = vmatprep.subr.mxu0 0.0
    %300 = vmatpush1.msra.mxu0 0.0
    %301 = vmatprep.subr.mxu0 0.0
    %302 = vmatpush1.msra.mxu0 0.0
    %303 = vmatprep.subr.mxu0 0.0
    %304 = vmatpush1.msra.mxu0 0.0
    %305 = vmatprep.subr.mxu0 0.0
    %306 = vmatpush1.msra.mxu0 0.0
    %307 = vmatprep.subr.mxu0 0.0
    %308 = vmatpush1.msra.mxu0 0.0
    %309 = vmatprep.subr.mxu0 0.0
    %310 = vmatpush1.msra.mxu0 0.0
    %311 = vmatprep.subr.mxu0 0.0
    %312 = vmatpush1.msra.mxu0 0.0
    %313 = vmatprep.subr.mxu0 0.0
    %314 = vmatpush1.msra.mxu0 0.0
    %315 = vmatprep.subr.mxu0 0.0
    %316 = vmatpush1.msra.mxu0 0.0
    %317 = vmatprep.subr.mxu0 0.0
    %318 = vmatpush1.msra.mxu0 0.0
    %319 = vmatprep.subr.mxu0 0.0
    %320 = vmatpush1.msra.mxu0 0.0
    %321 = vmatprep.subr.mxu0 0.0
    %322 = vmatpush1.msra.mxu0 0.0
    %323 = vmatprep.mubr.f32.mxu0 0.0
    %324 = vmatmul.mubr.f32.gmra.mrb[0].mxu0 %v176
    %v325 = vpop.f32.mrb[0].mxu0
    %v326 = vadd.f32 %v255, %v325
    %v327 = vpop.f32.mrb[0].mxu0
    %v328 = vadd.f32 %v257, %v327
    %329 = vdwg.mxu0
    %330 = vmatprep.subr.mxu0 0.0
    %331 = vmatpush1.msra.mxu0 %v31
    %332 = vmatprep.subr.mxu0 0.0
    %333 = vmatpush1.msra.mxu0 %v34
    %334 = vmatprep.subr.mxu0 0.0
    %335 = vmatpush1.msra.mxu0 %v37
    %336 = vmatprep.subr.mxu0 0.0
    %337 = vmatpush1.msra.mxu0 %v40
    %338 = vmatprep.subr.mxu0 0.0
    %339 = vmatpush1.msra.mxu0 %v43
    %340 = vmatprep.subr.mxu0 0.0
    %341 = vmatpush1.msra.mxu0 %v46
    %342 = vmatprep.subr.mxu0 0.0
    %343 = vmatpush1.msra.mxu0 %v49
    %344 = vmatprep.subr.mxu0 0.0
    %345 = vmatpush1.msra.mxu0 %v52
    %346 = vmatprep.subr.mxu0 0.0
    %347 = vmatpush1.msra.mxu0 %v55
    %348 = vmatprep.subr.mxu0 0.0
    %349 = vmatpush1.msra.mxu0 %v58
    %350 = vmatprep.subr.mxu0 0.0
    %351 = vmatpush1.msra.mxu0 %v61
    %352 = vmatprep.subr.mxu0 0.0
    %353 = vmatpush1.msra.mxu0 %v64
    %354 = vmatprep.subr.mxu0 0.0
    %355 = vmatpush1.msra.mxu0 %v67
    %356 = vmatprep.subr.mxu0 0.0
    %357 = vmatpush1.msra.mxu0 %v70
    %358 = vmatprep.subr.mxu0 0.0
    %359 = vmatpush1.msra.mxu0 %v73
    %360 = vmatprep.subr.mxu0 0.0
    %361 = vmatpush1.msra.mxu0 %v76
    %362 = vmatprep.subr.mxu0 0.0
    %363 = vmatpush1.msra.mxu0 %v79
    %364 = vmatprep.subr.mxu0 0.0
    %365 = vmatpush1.msra.mxu0 %v82
    %366 = vmatprep.subr.mxu0 0.0
    %367 = vmatpush1.msra.mxu0 %v85
    %368 = vmatprep.subr.mxu0 0.0
    %369 = vmatpush1.msra.mxu0 %v88
    %370 = vmatprep.subr.mxu0 0.0
    %371 = vmatpush1.msra.mxu0 %v91
    %372 = vmatprep.subr.mxu0 0.0
    %373 = vmatpush1.msra.mxu0 %v94
    %374 = vmatprep.subr.mxu0 0.0
    %375 = vmatpush1.msra.mxu0 %v97
    %376 = vmatprep.subr.mxu0 0.0
    %377 = vmatpush1.msra.mxu0 %v100
    %378 = vmatprep.subr.mxu0 0.0
    %379 = vmatpush1.msra.mxu0 %v103
    %380 = vmatprep.subr.mxu0 0.0
    %381 = vmatpush1.msra.mxu0 %v106
    %382 = vmatprep.subr.mxu0 0.0
    %383 = vmatpush1.msra.mxu0 %v109
    %384 = vmatprep.subr.mxu0 0.0
    %385 = vmatpush1.msra.mxu0 %v112
    %386 = vmatprep.subr.mxu0 0.0
    %387 = vmatpush1.msra.mxu0 %v115
    %388 = vmatprep.subr.mxu0 0.0
    %389 = vmatpush1.msra.mxu0 %v118
    %390 = vmatprep.subr.mxu0 0.0
    %391 = vmatpush1.msra.mxu0 %v121
    %392 = vmatprep.subr.mxu0 0.0
    %393 = vmatpush1.msra.mxu0 %v124
    %394 = vmatprep.mubr.f32.mxu0 %v152
    %395 = vmatmul.mubr.f32.gmra.mrb[0].mxu0 %v148
    %v396 = vpop.f32.mrb[0].mxu0
    %v397 = vadd.f32 %v171, %v396
    %v398 = vpop.f32.mrb[0].mxu0
    %399 = vdwg.mxu0
    %400 = vmatprep.subr.mxu0 0.0
    %401 = vmatpush1.msra.mxu0 %v127
    %402 = vmatprep.subr.mxu0 0.0
    %403 = vmatpush1.msra.mxu0 %v130
    %404 = vmatprep.subr.mxu0 0.0
    %405 = vmatpush1.msra.mxu0 %v133
    %406 = vmatprep.subr.mxu0 0.0
    %407 = vmatpush1.msra.mxu0 %v136
    %408 = vmatprep.subr.mxu0 0.0
    %409 = vmatpush1.msra.mxu0 %v139
    %410 = vmatprep.subr.mxu0 0.0
    %411 = vmatpush1.msra.mxu0 %v186
    %412 = vmatprep.subr.mxu0 0.0
    %413 = vmatpush1.msra.mxu0 0.0
    %414 = vmatprep.subr.mxu0 0.0
    %415 = vmatpush1.msra.mxu0 0.0
    %416 = vmatprep.subr.mxu0 0.0
    %417 = vmatpush1.msra.mxu0 0.0
    %418 = vmatprep.subr.mxu0 0.0
    %419 = vmatpush1.msra.mxu0 0.0
    %420 = vmatprep.subr.mxu0 0.0
    %421 = vmatpush1.msra.mxu0 0.0
    %422 = vmatprep.subr.mxu0 0.0
    %423 = vmatpush1.msra.mxu0 0.0
    %424 = vmatprep.subr.mxu0 0.0
    %425 = vmatpush1.msra.mxu0 0.0
    %426 = vmatprep.subr.mxu0 0.0
    %427 = vmatpush1.msra.mxu0 0.0
    %428 = vmatprep.subr.mxu0 0.0
    %429 = vmatpush1.msra.mxu0 0.0
    %430 = vmatprep.subr.mxu0 0.0
    %431 = vmatpush1.msra.mxu0 0.0
    %432 = vmatprep.subr.mxu0 0.0
    %433 = vmatpush1.msra.mxu0 0.0
    %434 = vmatprep.subr.mxu0 0.0
    %435 = vmatpush1.msra.mxu0 0.0
    %436 = vmatprep.subr.mxu0 0.0
    %437 = vmatpush1.msra.mxu0 0.0
    %438 = vmatprep.subr.mxu0 0.0
    %439 = vmatpush1.msra.mxu0 0.0
    %440 = vmatprep.subr.mxu0 0.0
    %441 = vmatpush1.msra.mxu0 0.0
    %442 = vmatprep.subr.mxu0 0.0
    %443 = vmatpush1.msra.mxu0 0.0
    %444 = vmatprep.subr.mxu0 0.0
    %445 = vmatpush1.msra.mxu0 0.0
    %446 = vmatprep.subr.mxu0 0.0
    %447 = vmatpush1.msra.mxu0 0.0
    %448 = vmatprep.subr.mxu0 0.0
    %449 = vmatpush1.msra.mxu0 0.0
    %450 = vmatprep.subr.mxu0 0.0
    %451 = vmatpush1.msra.mxu0 0.0
    %452 = vmatprep.subr.mxu0 0.0
    %453 = vmatpush1.msra.mxu0 0.0
    %454 = vmatprep.subr.mxu0 0.0
    %455 = vmatpush1.msra.mxu0 0.0
    %456 = vmatprep.subr.mxu0 0.0
    %457 = vmatpush1.msra.mxu0 0.0
    %458 = vmatprep.subr.mxu0 0.0
    %459 = vmatpush1.msra.mxu0 0.0
    %460 = vmatprep.subr.mxu0 0.0
    %461 = vmatpush1.msra.mxu0 0.0
    %462 = vmatprep.subr.mxu0 0.0
    %463 = vmatpush1.msra.mxu0 0.0
    %464 = vmatprep.mubr.f32.mxu0 0.0
    %465 = vmatmul.mubr.f32.gmra.mrb[0].mxu0 %v176
    %v466 = vpop.f32.mrb[0].mxu0
    %v467 = vadd.f32 %v397, %v466
    %v468 = vpop.f32.mrb[0].mxu0
    %469 = vdwg.mxu0
    %v473 = vcombine.low %v326, %v328
    %v475 = vunpack.c.l.s4 1966171168
    %v476 = vunpack.c.0.s8 %v475
    %v477 = vlaneseq
    %v478 = vshrl.u32 %v477, 7
    %v479 = vsub.s32 %v476, %v478
    %v480 = vrot.slane %v473, %v479
    %v482 = vunpack.c.l.s4 1966171168
    %v483 = vunpack.c.0.s8 %v482
    %v484 = vlaneseq
    %v485 = vshrl.u32 %v484, 7
    %v486 = vsub.s32 %v483, %v485
    %v487 = vrot.slane %v467, %v486
    %v488 = vcombine.low %v480, %v487
    %v490 = vunpack.c.l.s4 1966171168
    %v491 = vunpack.c.0.s8 %v490
    %v492 = vlaneseq
    %v493 = vshrl.u32 %v492, 7
    %v494 = vsub.s32 %v491, %v493
    %v495 = vrot.slane %v488, %v494
    %v497 = vlaneseq
    %vm498 = vcmp.ge.s32.totalorder %v497, 0
    %vm499 = vcmp.lt.s32.totalorder %v497, 300
    %vm500 = vmand %vm498, %vm499
    %501 = vst.msk [vmem:[%s3] sm:$0x7] %vm500, %v495
    // Predicated region
    $region18: #{fused_forward.1} parent=1 // pred_check
      _
    $region19: #{fused_forward.1} parent=1 // pred_check_branch
      %503 = sbr.rel (0) target = $region21
    $region20: #{fused_forward.1} parent=1 // pred_region
      _
    $region21: #{fused_forward.1} parent=1 // pred_fallthru
      _
    // Predicated region
    $region22: #{fused_forward.1} parent=1 // pred_check
      _
    $region23: #{fused_forward.1} parent=1 // pred_check_branch
      %505 = sbr.rel (0) target = $region25
    $region24: #{fused_forward.1} parent=1 // pred_region
      _
    $region25: #{fused_forward.1} parent=1 // pred_fallthru
      _
    %506 = vsyncpa [#allocation3], 1

</llo_original>
